<compile_context>
chip_gen: v7x
topology: tpu7x:2x2x1
jax: 0.10.0
libtpu: 0.0.40
codegen_flags: <defaults>
</compile_context>

<pallas_src>
import jax
import jax.numpy as jnp
from jax.experimental import pallas as pl
from jax.experimental.pallas import tpu as pltpu


# ---------------------------------------------------------------------------
# Fused kernel: both critics, 3 layers each, on one batch tile.
# ---------------------------------------------------------------------------
def _double_critic_kernel(s_ref, a_ref, w1s_ref, w1a_ref, b1_ref,
                          w2_ref, b2_ref, w3_ref, b3_ref, o_ref):
    # s_ref:  (BM, S)  bf16      a_ref:  (BM, A)  bf16
    # w1s_ref:(S, 2H)  bf16      w1a_ref:(A, 2H)  bf16   (critic c -> columns [c*H,(c+1)*H))
    # b1_ref: (1, 2H)  f32
    # w2_ref: (2, H, H) bf16     b2_ref: (2, H) f32
    # w3_ref: (2, H)   f32       b3_ref: (2,)   f32 (SMEM)
    # o_ref:  (2, BM)  f32       row c = q of critic c (lane-dense over the batch)
    H = w2_ref.shape[-1]
    s = s_ref[...]
    a = a_ref[...]

    # Layer 1, both critics fused along the output (lane) axis. The torch
    # cat([state, action]) is folded away: x @ W1 == s @ W1[:S] + a @ W1[S:].
    h12 = (jnp.dot(s, w1s_ref[...], preferred_element_type=jnp.float32)
           + jnp.dot(a, w1a_ref[...], preferred_element_type=jnp.float32)
           + b1_ref[...])                                   # (BM, 2H) f32
    h12 = jnp.maximum(h12, 0.0)

    for c in range(2):  # static unroll over the two critics
        # Layer 2
        h = h12[:, c * H:(c + 1) * H].astype(w2_ref.dtype)  # (BM, H) bf16
        h = jnp.dot(h, w2_ref[c], preferred_element_type=jnp.float32) + b2_ref[c]
        h = jnp.maximum(h, 0.0)                             # (BM, H) f32

        # Layer 3 (output dim 1): VPU multiply + lane reduction instead of an
        # MXU matmul that would use 1 of 128/256 output columns.
        q = jnp.sum(h * w3_ref[c], axis=-1) + b3_ref[c]     # (BM,) f32

        o_ref[c, :] = q                                     # lane-dense row store


def _round_up(x, m):
    return ((x + m - 1) // m) * m


def _choose_tile(B):
    # Per-grid-step overhead dominates -> big tiles. For large batches keep the
    # tile a multiple of 128 and ensure >=2 grid blocks so the "parallel" axis
    # can shard across v7x's two TensorCores (no-op on v5e/v6e).
    if B <= 256:
        BM = _round_up(max(B, 1), 8)                  # single block
    else:
        BM = min(512, _round_up((B + 1) // 2, 128))   # >=2 blocks, <=512 rows
    B_pad = _round_up(B, BM)
    return BM, B_pad


def double_critic_apply(state, action, params):
    """Returns (q1, q2), each (B, 1) float32.  `params` may be critic or target params."""
    B, S = state.shape
    _, A = action.shape
    H = params["w2"].shape[-1]

    BM, B_pad = _choose_tile(B)
    if B_pad != B:
        pad = B_pad - B
        state = jnp.pad(state, ((0, pad), (0, 0)))
        action = jnp.pad(action, ((0, pad), (0, 0)))

    # bf16 matmul operands (MXU-native, halves the HBM batch stream); f32 accumulation
    # inside the kernel via preferred_element_type. Biases / w3 stay f32.
    cdt = jnp.bfloat16
    state_c = state.astype(cdt)
    action_c = action.astype(cdt)
    w1s = params["w1s"].astype(cdt)
    w1a = params["w1a"].astype(cdt)
    w2 = params["w2"].astype(cdt)
    b1 = params["b1"].astype(jnp.float32)
    b2 = params["b2"].astype(jnp.float32)
    w3 = params["w3"].astype(jnp.float32)
    b3 = params["b3"].astype(jnp.float32)

    # Advisory cost estimate so XLA can overlap this tiny kernel with neighbors.
    flops = (2 * B_pad * (S + A) * (2 * H)      # fused layer 1 (both critics)
             + 2 * (2 * B_pad * H * H)          # layer 2, two critics
             + 2 * (3 * B_pad * H))             # layer 3 mul + reduce, two critics

    def _nbytes(x):
        return int(x.size) * x.dtype.itemsize

    bytes_accessed = (sum(_nbytes(t) for t in
                          (state_c, action_c, w1s, w1a, b1, w2, b2, w3, b3))
                      + 2 * B_pad * 4)
    cost = pl.CostEstimate(flops=int(flops), transcendentals=0,
                           bytes_accessed=int(bytes_accessed))

    out = pl.pallas_call(
        _double_critic_kernel,
        out_shape=jax.ShapeDtypeStruct((2, B_pad), jnp.float32),
        grid=(B_pad // BM,),
        in_specs=[
            pl.BlockSpec((BM, S), lambda m: (m, 0)),          # state tile
            pl.BlockSpec((BM, A), lambda m: (m, 0)),          # action tile
            pl.BlockSpec((S, 2 * H), lambda m: (0, 0)),       # W1 state rows, both critics
            pl.BlockSpec((A, 2 * H), lambda m: (0, 0)),       # W1 action rows, both critics
            pl.BlockSpec((1, 2 * H), lambda m: (0, 0)),       # b1, both critics
            pl.BlockSpec((2, H, H), lambda m: (0, 0, 0)),     # W2
            pl.BlockSpec((2, H), lambda m: (0, 0)),           # b2
            pl.BlockSpec((2, H), lambda m: (0, 0)),           # w3 (as rows, VPU path)
            pl.BlockSpec(memory_space=pltpu.MemorySpace.SMEM),  # b3 scalars
        ],
        out_specs=pl.BlockSpec((2, BM), lambda m: (0, m)),    # lane-dense (critic, batch)
        compiler_params=pltpu.CompilerParams(
            dimension_semantics=("parallel",),                # shard batch tiles on v7x 2-TC
        ),
        cost_estimate=cost,
    )(state_c, action_c, w1s, w1a, b1, w2, b2, w3, b3)

    q1 = out[0, :B][:, None]
    q2 = out[1, :B][:, None]
    return q1, q2


# ---------------------------------------------------------------------------
# Parameters: PyTorch nn.Linear default init U(-1/sqrt(fan_in), +1/sqrt(fan_in)),
# re-laid-out for the fused kernel (W1 split state/action and fused across critics).
# ---------------------------------------------------------------------------
def init_double_critic(key, state_dim, action_dim, hidden_dim):
    S, A, H = state_dim, action_dim, hidden_dim
    D = S + A

    def u(k, shape, fan_in):
        bound = 1.0 / (fan_in ** 0.5)
        return jax.random.uniform(k, shape, jnp.float32, -bound, bound)

    def one_critic(k):
        ks = jax.random.split(k, 6)
        w1 = u(ks[0], (H, D), D)          # torch layout (out, in)
        b1 = u(ks[1], (H,), D)
        w2 = u(ks[2], (H, H), H)
        b2 = u(ks[3], (H,), H)
        w3 = u(ks[4], (1, H), H)
        b3 = u(ks[5], (1,), H)
        w1t = w1.T                         # (D, H)
        return dict(w1s=w1t[:S], w1a=w1t[S:], b1=b1,
                    w2=w2.T, b2=b2, w3=w3[0], b3=b3[0])

    k1, k2 = jax.random.split(key)
    c1, c2 = one_critic(k1), one_critic(k2)
    params = {
        "w1s": jnp.concatenate([c1["w1s"], c2["w1s"]], axis=1),   # (S, 2H)
        "w1a": jnp.concatenate([c1["w1a"], c2["w1a"]], axis=1),   # (A, 2H)
        "b1":  jnp.concatenate([c1["b1"], c2["b1"]])[None, :],    # (1, 2H)
        "w2":  jnp.stack([c1["w2"], c2["w2"]], axis=0),           # (2, H, H)
        "b2":  jnp.stack([c1["b2"], c2["b2"]], axis=0),           # (2, H)
        "w3":  jnp.stack([c1["w3"], c2["w3"]], axis=0),           # (2, H)
        "b3":  jnp.stack([c1["b3"], c2["b3"]], axis=0),           # (2,)
    }
    # target nets: independent copy of the critic params (like copy.deepcopy in the spec)
    targets = jax.tree_util.tree_map(jnp.copy, params)
    return params, targets


# ---------------------------------------------------------------------------
# Pure-JAX f32 reference (same math as the PyTorch module) for correctness check.
# ---------------------------------------------------------------------------
def double_critic_ref(state, action, params):
    H = params["w2"].shape[-1]
    h12 = jnp.maximum(state @ params["w1s"] + action @ params["w1a"] + params["b1"], 0.0)
    qs = []
    for c in range(2):
        h = h12[:, c * H:(c + 1) * H]
        h = jnp.maximum(h @ params["w2"][c] + params["b2"][c], 0.0)
        q = h @ params["w3"][c][:, None] + params["b3"][c]
        qs.append(q)
    return qs[0], qs[1]


# ---------------------------------------------------------------------------
if __name__ == "__main__":
    state_dim = 64
    action_dim = 16
    hidden_dim = 32
    batch = 2

    key = jax.random.PRNGKey(0)
    k_param, k_state, k_action = jax.random.split(key, 3)

    critic_params, target_params = init_double_critic(k_param, state_dim, action_dim, hidden_dim)
    state = jax.random.normal(k_state, (batch, state_dim), jnp.float32)
    action = jax.random.normal(k_action, (batch, action_dim), jnp.float32)

    # forward(): twin critics
    q1, q2 = double_critic_apply(state, action, critic_params)
    q1 = jax.block_until_ready(q1)
    q2 = jax.block_until_ready(q2)
    assert q1.shape == (batch, 1) and q2.shape == (batch, 1), (q1.shape, q2.shape)

    # target(): same kernel, target params (copy of critics at init -> identical values)
    tq1, tq2 = double_critic_apply(state, action, target_params)
    tq1 = jax.block_until_ready(tq1)

    # correctness vs pure-JAX f32 reference (kernel uses bf16 matmul operands,
    # f32 accumulation -> loose tolerance)
    r1, r2 = double_critic_ref(state, action, critic_params)
    assert jnp.allclose(q1, r1, atol=5e-2, rtol=5e-2), (q1, r1)
    assert jnp.allclose(q2, r2, atol=5e-2, rtol=5e-2), (q2, r2)
    assert jnp.allclose(tq1, r1, atol=5e-2, rtol=5e-2)

    print("KERNEL_OK")
</pallas_src>

<mosaic_0001>
module attributes {stable_mosaic.version = 11 : i64} {
  func.func @_double_critic_kernel(%arg0: i32, %arg1: memref<8x64xbf16, #tpu.memory_space<vmem>>, %arg2: memref<8x16xbf16, #tpu.memory_space<vmem>>, %arg3: memref<64x64xbf16, #tpu.memory_space<vmem>>, %arg4: memref<16x64xbf16, #tpu.memory_space<vmem>>, %arg5: memref<1x64xf32, #tpu.memory_space<vmem>>, %arg6: memref<2x32x32xbf16, #tpu.memory_space<vmem>>, %arg7: memref<2x32xf32, #tpu.memory_space<vmem>>, %arg8: memref<2x32xf32, #tpu.memory_space<vmem>>, %arg9: memref<2xf32, #tpu.memory_space<smem>>, %arg10: memref<2x8xf32, #tpu.memory_space<vmem>>) attributes {dimension_semantics = [#tpu.dimension_semantics<parallel>], iteration_bounds = array<i64: 1>, scalar_prefetch = 0 : i64, scratch_operands = 0 : i64, tpu.core_type = #tpu.core_type<tc>, window_params = [{transform_indices = @transform_0, window_bounds = array<i64: 8, 64>}, {transform_indices = @transform_1, window_bounds = array<i64: 8, 16>}, {pipeline_mode = #tpu.pipeline_mode<synchronous>, transform_indices = @transform_2, window_bounds = array<i64: 64, 64>}, {pipeline_mode = #tpu.pipeline_mode<synchronous>, transform_indices = @transform_3, window_bounds = array<i64: 16, 64>}, {pipeline_mode = #tpu.pipeline_mode<synchronous>, transform_indices = @transform_4, window_bounds = array<i64: 1, 64>}, {pipeline_mode = #tpu.pipeline_mode<synchronous>, transform_indices = @transform_5, window_bounds = array<i64: 2, 32, 32>}, {pipeline_mode = #tpu.pipeline_mode<synchronous>, transform_indices = @transform_6, window_bounds = array<i64: 2, 32>}, {pipeline_mode = #tpu.pipeline_mode<synchronous>, transform_indices = @transform_7, window_bounds = array<i64: 2, 32>}, {transform_indices = @transform_8, window_bounds = array<i64: 2>}, {transform_indices = @transform_9, window_bounds = array<i64: 2, 8>}]} {
    %c0 = arith.constant 0 : index
    %c0_0 = arith.constant 0 : index
    %0 = vector.load %arg1[%c0, %c0_0] : memref<8x64xbf16, #tpu.memory_space<vmem>>, vector<8x64xbf16>
    %c0_1 = arith.constant 0 : index
    %c0_2 = arith.constant 0 : index
    %1 = vector.load %arg2[%c0_1, %c0_2] : memref<8x16xbf16, #tpu.memory_space<vmem>>, vector<8x16xbf16>
    %c0_3 = arith.constant 0 : index
    %c0_4 = arith.constant 0 : index
    %2 = vector.load %arg3[%c0_3, %c0_4] : memref<64x64xbf16, #tpu.memory_space<vmem>>, vector<64x64xbf16>
    %cst = arith.constant dense<0.000000e+00> : vector<8x64xf32>
    %3 = tpu.matmul %0, %2, %cst {dimension_numbers = #tpu.dot_dimension_numbers<[1], [0], [0], [1], [0, 0, 1, 1], [], []>} : vector<8x64xbf16>, vector<64x64xbf16>, vector<8x64xf32> -> vector<8x64xf32>
    %c0_5 = arith.constant 0 : index
    %c0_6 = arith.constant 0 : index
    %4 = vector.load %arg4[%c0_5, %c0_6] : memref<16x64xbf16, #tpu.memory_space<vmem>>, vector<16x64xbf16>
    %cst_7 = arith.constant dense<0.000000e+00> : vector<8x64xf32>
    %5 = tpu.matmul %1, %4, %cst_7 {dimension_numbers = #tpu.dot_dimension_numbers<[1], [0], [0], [1], [0, 0, 1, 1], [], []>} : vector<8x16xbf16>, vector<16x64xbf16>, vector<8x64xf32> -> vector<8x64xf32>
    %6 = arith.addf %3, %5 : vector<8x64xf32>
    %c0_8 = arith.constant 0 : index
    %c0_9 = arith.constant 0 : index
    %7 = vector.load %arg5[%c0_8, %c0_9] : memref<1x64xf32, #tpu.memory_space<vmem>>, vector<1x64xf32>
    %8 = vector.broadcast %7 : vector<1x64xf32> to vector<8x64xf32>
    %9 = arith.addf %6, %8 : vector<8x64xf32>
    %cst_10 = arith.constant 0.000000e+00 : f32
    %10 = vector.broadcast %cst_10 : f32 to vector<8x64xf32>
    %11 = arith.maximumf %9, %10 : vector<8x64xf32>
    %12 = vector.extract_strided_slice %11 {offsets = [0, 0], sizes = [8, 32], strides = [1, 1]} : vector<8x64xf32> to vector<8x32xf32>
    %13 = arith.truncf %12 : vector<8x32xf32> to vector<8x32xbf16>
    %c0_11 = arith.constant 0 : index
    %c0_12 = arith.constant 0 : index
    %c0_13 = arith.constant 0 : index
    %14 = vector.load %arg6[%c0_11, %c0_12, %c0_13] : memref<2x32x32xbf16, #tpu.memory_space<vmem>>, vector<1x32x32xbf16>
    %15 = vector.shape_cast %14 : vector<1x32x32xbf16> to vector<32x32xbf16>
    %cst_14 = arith.constant dense<0.000000e+00> : vector<8x32xf32>
    %16 = tpu.matmul %13, %15, %cst_14 {dimension_numbers = #tpu.dot_dimension_numbers<[1], [0], [0], [1], [0, 0, 1, 1], [], []>} : vector<8x32xbf16>, vector<32x32xbf16>, vector<8x32xf32> -> vector<8x32xf32>
    %c0_15 = arith.constant 0 : index
    %c0_16 = arith.constant 0 : index
    %17 = vector.load %arg7[%c0_15, %c0_16] : memref<2x32xf32, #tpu.memory_space<vmem>>, vector<1x32xf32>
    %18 = vector.shape_cast %17 : vector<1x32xf32> to vector<32xf32>
    %19 = vector.shape_cast %18 : vector<32xf32> to vector<1x32xf32>
    %20 = vector.broadcast %19 : vector<1x32xf32> to vector<8x32xf32>
    %21 = arith.addf %16, %20 : vector<8x32xf32>
    %cst_17 = arith.constant 0.000000e+00 : f32
    %22 = vector.broadcast %cst_17 : f32 to vector<8x32xf32>
    %23 = arith.maximumf %21, %22 : vector<8x32xf32>
    %c0_18 = arith.constant 0 : index
    %c0_19 = arith.constant 0 : index
    %24 = vector.load %arg8[%c0_18, %c0_19] : memref<2x32xf32, #tpu.memory_space<vmem>>, vector<1x32xf32>
    %25 = vector.shape_cast %24 : vector<1x32xf32> to vector<32xf32>
    %26 = vector.shape_cast %25 : vector<32xf32> to vector<1x32xf32>
    %27 = vector.broadcast %26 : vector<1x32xf32> to vector<8x32xf32>
    %28 = arith.mulf %23, %27 : vector<8x32xf32>
    %cst_20 = arith.constant dense<0.000000e+00> : vector<8xf32>
    %29 = vector.multi_reduction <add>, %28, %cst_20 [1] : vector<8x32xf32> to vector<8xf32>
    %c0_21 = arith.constant 0 : index
    %30 = memref.load %arg9[%c0_21] : memref<2xf32, #tpu.memory_space<smem>>
    %31 = vector.broadcast %30 : f32 to vector<8xf32>
    %32 = arith.addf %29, %31 : vector<8xf32>
    %c0_22 = arith.constant 0 : index
    %c0_23 = arith.constant 0 : index
    %33 = vector.load %arg10[%c0_22, %c0_23] : memref<2x8xf32, #tpu.memory_space<vmem>>, vector<1x8xf32>
    %34 = vector.shape_cast %33 : vector<1x8xf32> to vector<8xf32>
    %35 = vector.shape_cast %32 : vector<8xf32> to vector<1x8xf32>
    tpu.vector_store %arg10[%c0_22, %c0_23], %35 {strides = array<i32>} : memref<2x8xf32, #tpu.memory_space<vmem>>, vector<1x8xf32>,
    %36 = vector.extract_strided_slice %11 {offsets = [0, 32], sizes = [8, 32], strides = [1, 1]} : vector<8x64xf32> to vector<8x32xf32>
    %37 = arith.truncf %36 : vector<8x32xf32> to vector<8x32xbf16>
    %c1 = arith.constant 1 : index
    %c0_24 = arith.constant 0 : index
    %c0_25 = arith.constant 0 : index
    %38 = vector.load %arg6[%c1, %c0_24, %c0_25] : memref<2x32x32xbf16, #tpu.memory_space<vmem>>, vector<1x32x32xbf16>
    %39 = vector.shape_cast %38 : vector<1x32x32xbf16> to vector<32x32xbf16>
    %cst_26 = arith.constant dense<0.000000e+00> : vector<8x32xf32>
    %40 = tpu.matmul %37, %39, %cst_26 {dimension_numbers = #tpu.dot_dimension_numbers<[1], [0], [0], [1], [0, 0, 1, 1], [], []>} : vector<8x32xbf16>, vector<32x32xbf16>, vector<8x32xf32> -> vector<8x32xf32>
    %c1_27 = arith.constant 1 : index
    %c0_28 = arith.constant 0 : index
    %41 = vector.load %arg7[%c1_27, %c0_28] : memref<2x32xf32, #tpu.memory_space<vmem>>, vector<1x32xf32>
    %42 = vector.shape_cast %41 : vector<1x32xf32> to vector<32xf32>
    %43 = vector.shape_cast %42 : vector<32xf32> to vector<1x32xf32>
    %44 = vector.broadcast %43 : vector<1x32xf32> to vector<8x32xf32>
    %45 = arith.addf %40, %44 : vector<8x32xf32>
    %cst_29 = arith.constant 0.000000e+00 : f32
    %46 = vector.broadcast %cst_29 : f32 to vector<8x32xf32>
    %47 = arith.maximumf %45, %46 : vector<8x32xf32>
    %c1_30 = arith.constant 1 : index
    %c0_31 = arith.constant 0 : index
    %48 = vector.load %arg8[%c1_30, %c0_31] : memref<2x32xf32, #tpu.memory_space<vmem>>, vector<1x32xf32>
    %49 = vector.shape_cast %48 : vector<1x32xf32> to vector<32xf32>
    %50 = vector.shape_cast %49 : vector<32xf32> to vector<1x32xf32>
    %51 = vector.broadcast %50 : vector<1x32xf32> to vector<8x32xf32>
    %52 = arith.mulf %47, %51 : vector<8x32xf32>
    %cst_32 = arith.constant dense<0.000000e+00> : vector<8xf32>
    %53 = vector.multi_reduction <add>, %52, %cst_32 [1] : vector<8x32xf32> to vector<8xf32>
    %c1_33 = arith.constant 1 : index
    %54 = memref.load %arg9[%c1_33] : memref<2xf32, #tpu.memory_space<smem>>
    %55 = vector.broadcast %54 : f32 to vector<8xf32>
    %56 = arith.addf %53, %55 : vector<8xf32>
    %c1_34 = arith.constant 1 : index
    %c0_35 = arith.constant 0 : index
    %57 = vector.load %arg10[%c1_34, %c0_35] : memref<2x8xf32, #tpu.memory_space<vmem>>, vector<1x8xf32>
    %58 = vector.shape_cast %57 : vector<1x8xf32> to vector<8xf32>
    %59 = vector.shape_cast %56 : vector<8xf32> to vector<1x8xf32>
    tpu.vector_store %arg10[%c1_34, %c0_35], %59 {strides = array<i32>} : memref<2x8xf32, #tpu.memory_space<vmem>>, vector<1x8xf32>,
    return
  }
  func.func @transform_0(%arg0: i32) -> (i32, i32) {
    %c0_i32 = arith.constant 0 : i32
    %c0_i32_0 = arith.constant 0 : i32
    return %arg0, %c0_i32 : i32, i32
  }
  func.func @transform_1(%arg0: i32) -> (i32, i32) {
    %c0_i32 = arith.constant 0 : i32
    %c0_i32_0 = arith.constant 0 : i32
    return %arg0, %c0_i32 : i32, i32
  }
  func.func @transform_2(%arg0: i32) -> (i32, i32) {
    %c0_i32 = arith.constant 0 : i32
    %c0_i32_0 = arith.constant 0 : i32
    %c0_i32_1 = arith.constant 0 : i32
    return %c0_i32, %c0_i32_0 : i32, i32
  }
  func.func @transform_3(%arg0: i32) -> (i32, i32) {
    %c0_i32 = arith.constant 0 : i32
    %c0_i32_0 = arith.constant 0 : i32
    %c0_i32_1 = arith.constant 0 : i32
    return %c0_i32, %c0_i32_0 : i32, i32
  }
  func.func @transform_4(%arg0: i32) -> (i32, i32) {
    %c0_i32 = arith.constant 0 : i32
    %c0_i32_0 = arith.constant 0 : i32
    %c0_i32_1 = arith.constant 0 : i32
    return %c0_i32, %c0_i32_0 : i32, i32
  }
  func.func @transform_5(%arg0: i32) -> (i32, i32, i32) {
    %c0_i32 = arith.constant 0 : i32
    %c0_i32_0 = arith.constant 0 : i32
    %c0_i32_1 = arith.constant 0 : i32
    %c0_i32_2 = arith.constant 0 : i32
    return %c0_i32, %c0_i32_0, %c0_i32_1 : i32, i32, i32
  }
  func.func @transform_6(%arg0: i32) -> (i32, i32) {
    %c0_i32 = arith.constant 0 : i32
    %c0_i32_0 = arith.constant 0 : i32
    %c0_i32_1 = arith.constant 0 : i32
    return %c0_i32, %c0_i32_0 : i32, i32
  }
  func.func @transform_7(%arg0: i32) -> (i32, i32) {
    %c0_i32 = arith.constant 0 : i32
    %c0_i32_0 = arith.constant 0 : i32
    %c0_i32_1 = arith.constant 0 : i32
    return %c0_i32, %c0_i32_0 : i32, i32
  }
  func.func @transform_8(%arg0: i32) -> i32 {
    %c0_i32 = arith.constant 0 : i32
    %c0_i32_0 = arith.constant 0 : i32
    return %c0_i32 : i32
  }
  func.func @transform_9(%arg0: i32) -> (i32, i32) {
    %c0_i32 = arith.constant 0 : i32
    %c0_i32_0 = arith.constant 0 : i32
    return %c0_i32, %arg0 : i32, i32
  }
}

</mosaic_0001>

<llo_original>
// kernel: tpu_custom_call.1
$region0: #{tpu_custom_call.1}
  #allocation0 [shape = 'u32[]', space=smem, size = 0x4, offset = 0x4, fixed_abs, tag = 'smem constant byte address 0x4 - core index']
  #allocation1 [shape = 'u32[144,128]{1,0:T(1,128)}', space=vmem, size = 0x12000, scoped, tag = 'internal scratch']
  %s0 = inlined_call_operand.hbm [shape: bf16[8,64], index: 0, kind: input, shape index: {}]
  %s1 = inlined_call_operand.hbm [shape: bf16[8,16], index: 1, kind: input, shape index: {}]
  %s2 = inlined_call_operand.hbm [shape: bf16[64,64], index: 2, kind: input, shape index: {}]
  %s3 = inlined_call_operand.vmem [shape: bf16[16,64], index: 3, kind: input, shape index: {}]
  %s4 = inlined_call_operand.vmem [shape: f32[1,64], index: 4, kind: input, shape index: {}]
  %s5 = inlined_call_operand.hbm [shape: bf16[2,32,32], index: 5, kind: input, shape index: {}]
  %s6 = inlined_call_operand.vmem [shape: f32[2,32], index: 6, kind: input, shape index: {}]
  %s7 = inlined_call_operand.vmem [shape: f32[2,32], index: 7, kind: input, shape index: {}]
  %s8 = inlined_call_operand.vmem [shape: f32[2], index: 8, kind: input, shape index: {}]
  %s9 = inlined_call_operand.hbm [shape: f32[2,8], index: 9, kind: output, shape index: {}]
  %s10 = sld [smem:[#allocation0]]
  $region66: #{tpu_custom_call.1} parent=0
    _
  %s12 = ssub.s32 1, %s10
  %s13 = scalar_select 0, %s12, %s10
  $region1: #{tpu_custom_call.1} parent=0
    #allocation2 [shape = 'u8[2048]{0}', space=vmem, size = 0x800, scoped, tag = 'input window, operand 0, single buffered']
    #allocation3 [shape = 's32[1]{0}', space=sflag, size = 0x4, scoped, tag = 'scoped memory for tpu_custom_call.1']
    #allocation4 [shape = 's32[1]{0}', space=sflag, size = 0x4, scoped, tag = 'scoped memory for tpu_custom_call.1']
    #allocation5 [shape = 's32[1]{0}', space=sflag, size = 0x4, scoped, tag = 'scoped memory for tpu_custom_call.1']
    #allocation6 [shape = 'u8[2048]{0}', space=vmem, size = 0x800, scoped, tag = 'input window, operand 1, single buffered']
    #allocation7 [shape = 's32[1]{0}', space=sflag, size = 0x4, scoped, tag = 'scoped memory for tpu_custom_call.1']
    #allocation8 [shape = 'u8[16384]{0}', space=vmem, size = 0x4000, scoped, tag = 'input window, operand 2, single buffered']
    #allocation9 [shape = 'u8[16384]{0}', space=vmem, size = 0x4000, scoped, tag = 'input window, operand 5, single buffered']
    #allocation10 [shape = 's32[1]{0}', space=sflag, size = 0x4, scoped, tag = 'scoped memory for tpu_custom_call.1']
    #allocation11 [shape = 'u8[512]{0}', space=smem, size = 0x200, scoped, tag = 'input window, operand 8, single buffered']
    #allocation12 [shape = 'u8[1024]{0}', space=vmem, size = 0x400, scoped, tag = 'output window, operand 0, single buffered']
    %14 = vsyncpa [#allocation3], 0
    %15 = vsyncpa [#allocation7], 0
    %16 = vsyncpa [#allocation10], 0
    %17 = vsyncpa [#allocation5], 0
    %18 = vsyncpa [#allocation4], 0
    // Predicated region
    $region2: #{tpu_custom_call.1} parent=1 // pred_check
      _
    $region3: #{tpu_custom_call.1} parent=1 // pred_check_branch
      %20 = sbr.rel (0) target = $region5
    $region4: #{tpu_custom_call.1} parent=1 // pred_region
      %s22 = ssub.s32 64, 64
      %23 = vsyncadd [#allocation3], %s22
      %s25 = sshll.u32 [#allocation2], 4
      %s26 = int_to_ptr.vmem [resolvable:$true] %s25
      %28 = dma.hbm_to_vmem [thread:$0]  %s0, 64, %s26, [#allocation3]
    $region5: #{tpu_custom_call.1} parent=1 // pred_fallthru
      _
    // Predicated region
    $region6: #{tpu_custom_call.1} parent=1 // pred_check
      _
    $region7: #{tpu_custom_call.1} parent=1 // pred_check_branch
      %30 = sbr.rel (0) target = $region9
    $region8: #{tpu_custom_call.1} parent=1 // pred_region
      %s32 = ssub.s32 64, 64
      %33 = vsyncadd [#allocation7], %s32
      %s35 = sshll.u32 [#allocation6], 4
      %s36 = int_to_ptr.vmem [resolvable:$true] %s35
      %38 = dma.hbm_to_vmem [thread:$0]  %s1, 64, %s36, [#allocation7]
    $region9: #{tpu_custom_call.1} parent=1 // pred_fallthru
      _
    // Predicated region
    $region10: #{tpu_custom_call.1} parent=1 // pred_check
      _
    $region11: #{tpu_custom_call.1} parent=1 // pred_check_branch
      %40 = sbr.rel (0) target = $region13
    $region12: #{tpu_custom_call.1} parent=1 // pred_region
      %s42 = ssub.s32 512, 512
      %43 = vsyncadd [#allocation7], %s42
      %s44 = sshll.u32 [#allocation8], 4
      %s45 = int_to_ptr.vmem [resolvable:$true] %s44
      %50 = dma.hbm_to_vmem [thread:$0]  %s2, 512, %s45, [#allocation7], 64, 64, 4
    $region13: #{tpu_custom_call.1} parent=1 // pred_fallthru
      _
    // Predicated region
    $region14: #{tpu_custom_call.1} parent=1 // pred_check
      _
    $region15: #{tpu_custom_call.1} parent=1 // pred_check_branch
      %52 = sbr.rel (0) target = $region17
    $region16: #{tpu_custom_call.1} parent=1 // pred_region
      _
    $region17: #{tpu_custom_call.1} parent=1 // pred_fallthru
      _
    // Predicated region
    $region18: #{tpu_custom_call.1} parent=1 // pred_check
      _
    $region19: #{tpu_custom_call.1} parent=1 // pred_check_branch
      %54 = sbr.rel (0) target = $region21
    $region20: #{tpu_custom_call.1} parent=1 // pred_region
      _
    $region21: #{tpu_custom_call.1} parent=1 // pred_fallthru
      _
    // Predicated region
    $region22: #{tpu_custom_call.1} parent=1 // pred_check
      _
    $region23: #{tpu_custom_call.1} parent=1 // pred_check_branch
      %56 = sbr.rel (0) target = $region25
    $region24: #{tpu_custom_call.1} parent=1 // pred_region
      %s58 = ssub.s32 512, 512
      %59 = vsyncadd [#allocation10], %s58
      %s60 = sshll.u32 [#allocation9], 4
      %s61 = int_to_ptr.vmem [resolvable:$true] %s60
      %66 = dma.hbm_to_vmem [thread:$0]  %s5, 512, %s61, [#allocation10], 64, 64, 4
    $region25: #{tpu_custom_call.1} parent=1 // pred_fallthru
      _
    // Predicated region
    $region26: #{tpu_custom_call.1} parent=1 // pred_check
      _
    $region27: #{tpu_custom_call.1} parent=1 // pred_check_branch
      %68 = sbr.rel (0) target = $region29
    $region28: #{tpu_custom_call.1} parent=1 // pred_region
      _
    $region29: #{tpu_custom_call.1} parent=1 // pred_fallthru
      _
    // Predicated region
    $region30: #{tpu_custom_call.1} parent=1 // pred_check
      _
    $region31: #{tpu_custom_call.1} parent=1 // pred_check_branch
      %70 = sbr.rel (0) target = $region33
    $region32: #{tpu_custom_call.1} parent=1 // pred_region
      _
    $region33: #{tpu_custom_call.1} parent=1 // pred_fallthru
      _
    // Predicated region
    $region34: #{tpu_custom_call.1} parent=1 // pred_check
      _
    $region35: #{tpu_custom_call.1} parent=1 // pred_check_branch
      %72 = sbr.rel (0) target = $region37
    $region36: #{tpu_custom_call.1} parent=1 // pred_region
      %s74 = ssub.s32 16, 16
      %75 = vsyncadd [#allocation5], %s74
      %s77 = sshll.u32 %s8, 4
      %s78 = int_to_ptr.vmem [resolvable:$true] %s77
      %80 = dma.vmem_to_smem %s78, 16, [#allocation11], [#allocation5]
    $region37: #{tpu_custom_call.1} parent=1 // pred_fallthru
      _
    // Predicated region
    $region38: #{tpu_custom_call.1} parent=1 // pred_check
      _
    $region39: #{tpu_custom_call.1} parent=1 // pred_check_branch
      %82 = sbr.rel (0) target = $region41
    $region40: #{tpu_custom_call.1} parent=1 // pred_region
      %83 = dma.done [#allocation3], 64
    $region41: #{tpu_custom_call.1} parent=1 // pred_fallthru
      _
    // Predicated region
    $region42: #{tpu_custom_call.1} parent=1 // pred_check
      _
    $region43: #{tpu_custom_call.1} parent=1 // pred_check_branch
      %85 = sbr.rel (0) target = $region45
    $region44: #{tpu_custom_call.1} parent=1 // pred_region
      %86 = dma.done [#allocation7], 64
    $region45: #{tpu_custom_call.1} parent=1 // pred_fallthru
      _
    // Predicated region
    $region46: #{tpu_custom_call.1} parent=1 // pred_check
      _
    $region47: #{tpu_custom_call.1} parent=1 // pred_check_branch
      %88 = sbr.rel (0) target = $region49
    $region48: #{tpu_custom_call.1} parent=1 // pred_region
      %89 = dma.done [#allocation7], 512
    $region49: #{tpu_custom_call.1} parent=1 // pred_fallthru
      _
    // Predicated region
    $region50: #{tpu_custom_call.1} parent=1 // pred_check
      _
    $region51: #{tpu_custom_call.1} parent=1 // pred_check_branch
      %91 = sbr.rel (0) target = $region53
    $region52: #{tpu_custom_call.1} parent=1 // pred_region
      %92 = dma.done [#allocation10], 512
    $region53: #{tpu_custom_call.1} parent=1 // pred_fallthru
      _
    // Predicated region
    $region54: #{tpu_custom_call.1} parent=1 // pred_check
      _
    $region55: #{tpu_custom_call.1} parent=1 // pred_check_branch
      %94 = sbr.rel (0) target = $region57
    $region56: #{tpu_custom_call.1} parent=1 // pred_region
      %95 = dma.done [#allocation5], 16
    $region57: #{tpu_custom_call.1} parent=1 // pred_fallthru
      _
    %96 = sfence
    %v98 = vld [vmem:[#allocation2] sm:$0xf]
    %v99 = vld [vmem:[#allocation6] sm:$0xf]
    %v100 = vld [vmem:[#allocation8] sm:$0xf]
    %v101 = vld [vmem:[#allocation8 + $0x4] sm:$0xf]
    %v102 = vld [vmem:[#allocation8 + $0x8] sm:$0xf]
    %v103 = vld [vmem:[#allocation8 + $0xc] sm:$0xf]
    %v104 = vld [vmem:[#allocation8 + $0x10] sm:$0xf]
    %v105 = vld [vmem:[#allocation8 + $0x14] sm:$0xf]
    %v106 = vld [vmem:[#allocation8 + $0x18] sm:$0xf]
    %v107 = vld [vmem:[#allocation8 + $0x1c] sm:$0xf]
    %v108 = vld [vmem:[%s3] sm:$0xf]
    %v109 = vld [vmem:[%s3 + $0x4] sm:$0xf]
    %v112 = vunpack.c.l.b16 %v108
    %v113 = vunpack.c.l.b16 %v109
    %v114 = vpack.c.b16 %v113, %v112
    %vm116 = vcmask 130048
    %v118 = vsel %vm116, %v99, 0
    %120 = vmatprep.subr.bf16.mxu0 0
    %121 = vmatpush1.bf16.msra.mxu0 %v114
    %122 = vmatprep.subr.bf16.mxu0 0
    %123 = vmatpush1.bf16.msra.mxu0 0
    %124 = vmatprep.subr.bf16.mxu0 0
    %125 = vmatpush1.bf16.msra.mxu0 0
    %126 = vmatprep.subr.bf16.mxu0 0
    %127 = vmatpush1.bf16.msra.mxu0 0
    %128 = vmatprep.subr.bf16.mxu0 0
    %129 = vmatpush1.bf16.msra.mxu0 0
    %130 = vmatprep.subr.bf16.mxu0 0
    %131 = vmatpush1.bf16.msra.mxu0 0
    %132 = vmatprep.subr.bf16.mxu0 0
    %133 = vmatpush1.bf16.msra.mxu0 0
    %134 = vmatprep.subr.bf16.mxu0 0
    %135 = vmatpush1.bf16.msra.mxu0 0
    %136 = vmatprep.subr.bf16.mxu0 0
    %137 = vmatpush1.bf16.msra.mxu0 0
    %138 = vmatprep.subr.bf16.mxu0 0
    %139 = vmatpush1.bf16.msra.mxu0 0
    %140 = vmatprep.subr.bf16.mxu0 0
    %141 = vmatpush1.bf16.msra.mxu0 0
    %142 = vmatprep.subr.bf16.mxu0 0
    %143 = vmatpush1.bf16.msra.mxu0 0
    %144 = vmatprep.subr.bf16.mxu0 0
    %145 = vmatpush1.bf16.msra.mxu0 0
    %146 = vmatprep.subr.bf16.mxu0 0
    %147 = vmatpush1.bf16.msra.mxu0 0
    %148 = vmatprep.subr.bf16.mxu0 0
    %149 = vmatpush1.bf16.msra.mxu0 0
    %150 = vmatprep.subr.bf16.mxu0 0
    %151 = vmatpush1.bf16.msra.mxu0 0
    %152 = vmatprep.mubr.bf16.mxu0 0
    %153 = vmatmul.mubr.bf16.gmra.mrb[0].mxu0 %v118
    %v154 = vpop.f32.mrb[0].mxu0
    %v155 = vadd.f32 0.0, %v154
    %v156 = vpop.f32.mrb[0].mxu0
    %v157 = vpop.f32.mrb[0].mxu0
    %v158 = vpop.f32.mrb[0].mxu0
    %159 = vdwg.mxu0
    %v168 = vunpack.c.l.b16 %v100
    %v169 = vunpack.c.l.b16 %v101
    %v170 = vunpack.c.l.b16 %v102
    %v171 = vunpack.c.l.b16 %v103
    %v172 = vunpack.c.l.b16 %v104
    %v173 = vunpack.c.l.b16 %v105
    %v174 = vunpack.c.l.b16 %v106
    %v175 = vunpack.c.l.b16 %v107
    %v176 = vpack.c.b16 %v169, %v168
    %v177 = vpack.c.b16 %v171, %v170
    %v178 = vpack.c.b16 %v173, %v172
    %v179 = vpack.c.b16 %v175, %v174
    %vm184 = vcmask 523264
    %v186 = vsel %vm184, %v98, 0
    %188 = vmatprep.subr.bf16.mxu0 0
    %189 = vmatpush1.bf16.msra.mxu0 %v176
    %190 = vmatprep.subr.bf16.mxu0 0
    %191 = vmatpush1.bf16.msra.mxu0 %v177
    %192 = vmatprep.subr.bf16.mxu0 0
    %193 = vmatpush1.bf16.msra.mxu0 %v178
    %194 = vmatprep.subr.bf16.mxu0 0
    %195 = vmatpush1.bf16.msra.mxu0 %v179
    %196 = vmatprep.subr.bf16.mxu0 0
    %197 = vmatpush1.bf16.msra.mxu0 0
    %198 = vmatprep.subr.bf16.mxu0 0
    %199 = vmatpush1.bf16.msra.mxu0 0
    %200 = vmatprep.subr.bf16.mxu0 0
    %201 = vmatpush1.bf16.msra.mxu0 0
    %202 = vmatprep.subr.bf16.mxu0 0
    %203 = vmatpush1.bf16.msra.mxu0 0
    %204 = vmatprep.subr.bf16.mxu0 0
    %205 = vmatpush1.bf16.msra.mxu0 0
    %206 = vmatprep.subr.bf16.mxu0 0
    %207 = vmatpush1.bf16.msra.mxu0 0
    %208 = vmatprep.subr.bf16.mxu0 0
    %209 = vmatpush1.bf16.msra.mxu0 0
    %210 = vmatprep.subr.bf16.mxu0 0
    %211 = vmatpush1.bf16.msra.mxu0 0
    %212 = vmatprep.subr.bf16.mxu0 0
    %213 = vmatpush1.bf16.msra.mxu0 0
    %214 = vmatprep.subr.bf16.mxu0 0
    %215 = vmatpush1.bf16.msra.mxu0 0
    %216 = vmatprep.subr.bf16.mxu0 0
    %217 = vmatpush1.bf16.msra.mxu0 0
    %218 = vmatprep.subr.bf16.mxu0 0
    %219 = vmatpush1.bf16.msra.mxu0 0
    %220 = vmatprep.mubr.bf16.mxu0 0
    %221 = vmatmul.mubr.bf16.gmra.mrb[0].mxu0 %v186
    %v222 = vpop.f32.mrb[0].mxu0
    %v223 = vadd.f32 %v155, %v222
    %v224 = vpop.f32.mrb[0].mxu0
    %v225 = vpop.f32.mrb[0].mxu0
    %v226 = vpop.f32.mrb[0].mxu0
    %227 = vdwg.mxu0
    %v228 = vld [vmem:[%s4] sm:$0x1]
    %v230 = vlaneseq
    %v231 = vshrl.u32 %v230, 7
    %v232 = vsub.s32 0, %v231
    %v233 = vrot.slane %v228, %v232
    %v235 = vadd.f32 %v223, %v233
    %v236 = vmax.f32 %v235, 0.0
    %v237 = vpack.c.bf16 %v236, %v236
    %v238 = vld [vmem:[#allocation9] sm:$0xf]
    %v239 = vld [vmem:[#allocation9 + $0x4] sm:$0xf]
    %v240 = vld [vmem:[#allocation9 + $0x8] sm:$0xf]
    %v241 = vld [vmem:[#allocation9 + $0xc] sm:$0xf]
    %v242 = vld [vmem:[%s6] sm:$0x1]
    %v243 = vlaneseq
    %v244 = vshrl.u32 %v243, 7
    %v245 = vsub.s32 0, %v244
    %v246 = vrot.slane %v242, %v245
    %v251 = vunpack.c.l.b16 %v238
    %v252 = vunpack.c.l.b16 %v239
    %v253 = vunpack.c.l.b16 %v240
    %v254 = vunpack.c.l.b16 %v241
    %v255 = vpack.c.b16 %v252, %v251
    %v256 = vpack.c.b16 %v254, %v253
    %vm259 = vcmask 261120
    %v261 = vsel %vm259, %v237, 0
    %263 = vmatprep.subr.bf16.mxu0 0
    %264 = vmatpush1.bf16.msra.mxu0 %v255
    %265 = vmatprep.subr.bf16.mxu0 0
    %266 = vmatpush1.bf16.msra.mxu0 %v256
    %267 = vmatprep.subr.bf16.mxu0 0
    %268 = vmatpush1.bf16.msra.mxu0 0
    %269 = vmatprep.subr.bf16.mxu0 0
    %270 = vmatpush1.bf16.msra.mxu0 0
    %271 = vmatprep.subr.bf16.mxu0 0
    %272 = vmatpush1.bf16.msra.mxu0 0
    %273 = vmatprep.subr.bf16.mxu0 0
    %274 = vmatpush1.bf16.msra.mxu0 0
    %275 = vmatprep.subr.bf16.mxu0 0
    %276 = vmatpush1.bf16.msra.mxu0 0
    %277 = vmatprep.subr.bf16.mxu0 0
    %278 = vmatpush1.bf16.msra.mxu0 0
    %279 = vmatprep.subr.bf16.mxu0 0
    %280 = vmatpush1.bf16.msra.mxu0 0
    %281 = vmatprep.subr.bf16.mxu0 0
    %282 = vmatpush1.bf16.msra.mxu0 0
    %283 = vmatprep.subr.bf16.mxu0 0
    %284 = vmatpush1.bf16.msra.mxu0 0
    %285 = vmatprep.subr.bf16.mxu0 0
    %286 = vmatpush1.bf16.msra.mxu0 0
    %287 = vmatprep.subr.bf16.mxu0 0
    %288 = vmatpush1.bf16.msra.mxu0 0
    %289 = vmatprep.subr.bf16.mxu0 0
    %290 = vmatpush1.bf16.msra.mxu0 0
    %291 = vmatprep.subr.bf16.mxu0 0
    %292 = vmatpush1.bf16.msra.mxu0 0
    %293 = vmatprep.subr.bf16.mxu0 0
    %294 = vmatpush1.bf16.msra.mxu0 0
    %295 = vmatprep.mubr.bf16.mxu0 0
    %296 = vmatmul.mubr.bf16.gmra.mrb[0].mxu0 %v261
    %v297 = vpop.f32.mrb[0].mxu0
    %v298 = vadd.f32 %v246, %v297
    %v299 = vpop.f32.mrb[0].mxu0
    %v300 = vpop.f32.mrb[0].mxu0
    %v301 = vpop.f32.mrb[0].mxu0
    %302 = vdwg.mxu0
    %v303 = vmax.f32 %v298, 0.0
    %v304 = vld [vmem:[%s7] sm:$0x1]
    %v305 = vlaneseq
    %v306 = vshrl.u32 %v305, 7
    %v307 = vsub.s32 0, %v306
    %v308 = vrot.slane %v304, %v307
    %v309 = vmul.f32 %v303, %v308
    %v310 = vsel %vm259, %v309, 0.0
    %311 = vadd.xlane.f32.xlu0 %v310
    %v312 = vpop.xlane.xlu0 %311
    %s313 = sld [smem:[#allocation11]]
    %v314 = vstv %s313
    %v315 = vadd.f32 %v312, %v314
    %v317 = vlaneseq
    %v318 = vand.u32 %v317, 127
    %v319 = vlaneseq
    %v320 = vshrl.u32 %v319, 7
    %v321 = vsub.s32 %v318, %v320
    %v322 = vrot.slane %v315, %v321
    %vm324 = vcmask 57344
    %325 = vst.msk [vmem:[#allocation12] sm:$0x1] %vm324, %v322
    %s326 = scalar_lea.vmem [#allocation9], 16
    %v327 = vld [vmem:[%s326] sm:$0xf]
    %v328 = vld [vmem:[%s326 + $0x4] sm:$0xf]
    %v329 = vld [vmem:[%s326 + $0x8] sm:$0xf]
    %v330 = vld [vmem:[%s326 + $0xc] sm:$0xf]
    %v331 = vld [vmem:[%s6 + $0x1] sm:$0x1]
    %v332 = vlaneseq
    %v333 = vshrl.u32 %v332, 7
    %v334 = vsub.s32 0, %v333
    %v335 = vrot.slane %v331, %v334
    %337 = vrot.lane.b32.xlu0 %v237, 96
    %v338 = vpop.permute.xlu0 %337
    %v343 = vunpack.c.l.b16 %v327
    %v344 = vunpack.c.l.b16 %v328
    %v345 = vunpack.c.l.b16 %v329
    %v346 = vunpack.c.l.b16 %v330
    %v347 = vpack.c.b16 %v344, %v343
    %v348 = vpack.c.b16 %v346, %v345
    %v352 = vsel %vm259, %v338, 0
    %354 = vmatprep.subr.bf16.mxu0 0
    %355 = vmatpush1.bf16.msra.mxu0 %v347
    %356 = vmatprep.subr.bf16.mxu0 0
    %357 = vmatpush1.bf16.msra.mxu0 %v348
    %358 = vmatprep.subr.bf16.mxu0 0
    %359 = vmatpush1.bf16.msra.mxu0 0
    %360 = vmatprep.subr.bf16.mxu0 0
    %361 = vmatpush1.bf16.msra.mxu0 0
    %362 = vmatprep.subr.bf16.mxu0 0
    %363 = vmatpush1.bf16.msra.mxu0 0
    %364 = vmatprep.subr.bf16.mxu0 0
    %365 = vmatpush1.bf16.msra.mxu0 0
    %366 = vmatprep.subr.bf16.mxu0 0
    %367 = vmatpush1.bf16.msra.mxu0 0
    %368 = vmatprep.subr.bf16.mxu0 0
    %369 = vmatpush1.bf16.msra.mxu0 0
    %370 = vmatprep.subr.bf16.mxu0 0
    %371 = vmatpush1.bf16.msra.mxu0 0
    %372 = vmatprep.subr.bf16.mxu0 0
    %373 = vmatpush1.bf16.msra.mxu0 0
    %374 = vmatprep.subr.bf16.mxu0 0
    %375 = vmatpush1.bf16.msra.mxu0 0
    %376 = vmatprep.subr.bf16.mxu0 0
    %377 = vmatpush1.bf16.msra.mxu0 0
    %378 = vmatprep.subr.bf16.mxu0 0
    %379 = vmatpush1.bf16.msra.mxu0 0
    %380 = vmatprep.subr.bf16.mxu0 0
    %381 = vmatpush1.bf16.msra.mxu0 0
    %382 = vmatprep.subr.bf16.mxu0 0
    %383 = vmatpush1.bf16.msra.mxu0 0
    %384 = vmatprep.subr.bf16.mxu0 0
    %385 = vmatpush1.bf16.msra.mxu0 0
    %386 = vmatprep.mubr.bf16.mxu0 0
    %387 = vmatmul.mubr.bf16.gmra.mrb[0].mxu0 %v352
    %v388 = vpop.f32.mrb[0].mxu0
    %v389 = vadd.f32 %v335, %v388
    %v390 = vpop.f32.mrb[0].mxu0
    %v391 = vpop.f32.mrb[0].mxu0
    %v392 = vpop.f32.mrb[0].mxu0
    %393 = vdwg.mxu0
    %v394 = vmax.f32 %v389, 0.0
    %v395 = vld [vmem:[%s7 + $0x1] sm:$0x1]
    %v396 = vlaneseq
    %v397 = vshrl.u32 %v396, 7
    %v398 = vsub.s32 0, %v397
    %v399 = vrot.slane %v395, %v398
    %v400 = vmul.f32 %v394, %v399
    %v401 = vsel %vm259, %v400, 0.0
    %402 = vadd.xlane.f32.xlu0 %v401
    %v403 = vpop.xlane.xlu0 %402
    %s404 = sld [smem:[#allocation11 + $0x1]]
    %v405 = vstv %s404
    %v406 = vadd.f32 %v403, %v405
    %v408 = vlaneseq
    %v409 = vshrl.u32 %v408, 7
    %v410 = vsub.s32 %v318, %v409
    %v411 = vrot.slane %v406, %v410
    %413 = vst.msk [vmem:[#allocation12 + $0x1] sm:$0x1] %vm324, %v411
    // Predicated region
    $region58: #{tpu_custom_call.1} parent=1 // pred_check
      _
    $region59: #{tpu_custom_call.1} parent=1 // pred_check_branch
      %415 = sbr.rel (0) target = $region61
    $region60: #{tpu_custom_call.1} parent=1 // pred_region
      %s417 = ssub.s32 32, 32
      %418 = vsyncadd [#allocation4], %s417
      %s420 = sshll.u32 [#allocation12], 4
      %s421 = int_to_ptr.vmem [resolvable:$true] %s420
      %423 = dma.vmem_to_hbm [thread:$0]  %s421, 32, %s9, [#allocation4]
    $region61: #{tpu_custom_call.1} parent=1 // pred_fallthru
      _
    // Predicated region
    $region62: #{tpu_custom_call.1} parent=1 // pred_check
      _
    $region63: #{tpu_custom_call.1} parent=1 // pred_check_branch
      %425 = sbr.rel (0) target = $region65
    $region64: #{tpu_custom_call.1} parent=1 // pred_region
      %426 = dma.done [#allocation4], 32
    $region65: #{tpu_custom_call.1} parent=1 // pred_fallthru
      _
    %427 = vsyncpa [#allocation3], 1
    %428 = vsyncpa [#allocation7], 1
    %429 = vsyncpa [#allocation10], 1
    %430 = vsyncpa [#allocation4], 1
    %431 = vsyncpa [#allocation5], 1

</llo_original>
